<compile_context>
chip_gen: v7x
topology: tpu7x:2x2x1
jax: 0.10.0
libtpu: 0.0.40
codegen_flags: <defaults>
</compile_context>

<pallas_src>
import functools

import numpy as np
import jax
import jax.numpy as jnp
from jax import lax
from jax.experimental import pallas as pl
from jax.experimental.pallas import tpu as pltpu


def _qmsan_kernel(x_ref, wt_ref, sel_ref, o_ref, *, b_blk, S, Hp, dA, dB):
    # x_ref:  (b_blk*S, E)   wt_ref: (E, Hp)   sel_ref: (dA*E, dA*dA)
    # o_ref:  (b_blk*S, Hp)
    x = x_ref[...]                                   # (rows, E)  f32
    wt = wt_ref[...]                                 # (E, Hp)    pre-transposed
    sel = sel_ref[...]                               # (dA*E, dA*dA) 0/1 const

    # --- V projection: all rows of the block in one MXU matmul -------------
    V = jnp.dot(x, wt, preferred_element_type=jnp.float32)        # (rows, Hp)

    # --- amplitude embedding: L2-normalize each token (EUP rsqrt) ----------
    psi = x * lax.rsqrt(jnp.sum(x * x, axis=-1, keepdims=True))    # (rows, E)

    # --- reduced density matrix over first n//2 qubits, flattened ----------
    #   rho_flat[r, a*dA + a'] = sum_b psi[r, a*dB + b] * psi[r, a'*dB + b]
    # Built as elementwise products (VPU) + one MXU contraction against the
    # constant block-diagonal selector -- no cross-lane XLU reductions.
    pieces = []
    for a in range(dA):                              # static, trace-time unroll
        pa = psi[:, a * dB:(a + 1) * dB]                          # (rows, dB)
        pa_rep = jnp.concatenate([pa] * dA, axis=-1)              # (rows, E)
        pieces.append(pa_rep * psi)
    prod = jnp.concatenate(pieces, axis=-1)                       # (rows, dA*E)
    rho_flat = jnp.dot(prod, sel,
                       preferred_element_type=jnp.float32)        # (rows, dA*dA)

    # --- lower-triangular (inclusive) mask: built once, reused per batch ---
    row_id = lax.broadcasted_iota(jnp.int32, (S, S), 0)
    col_id = lax.broadcasted_iota(jnp.int32, (S, S), 1)
    keep = col_id <= row_id

    # --- per-batch Gram / L1 normalization / output projection -------------
    # b_blk is small and static; static slices are sublane-aligned (S % 8 == 0
    # is guaranteed by the wrapper's block choice).
    for b in range(b_blk):
        r = rho_flat[b * S:(b + 1) * S, :]                        # (S, dA*dA)
        v = V[b * S:(b + 1) * S, :]                               # (S, Hp)
        # G[i, j] = <rho_i, rho_j>_F = trace(rho_i rho_j); contract last dims
        # directly (no materialized transpose).
        G = lax.dot_general(r, r, (((1,), (1,)), ((), ())),
                            preferred_element_type=jnp.float32)   # (S, S)
        attn = jnp.where(keep, G, jnp.float32(0.0))
        # trace(rho_i rho_j) >= 0 and masked entries are exactly 0, so the L1
        # norm needs no abs (F.normalize p=1, eps=1e-12 semantics).
        denom = jnp.maximum(jnp.sum(attn, axis=-1, keepdims=True),
                            jnp.float32(1e-12))
        # reciprocal-multiply instead of an (S,S) divide; approx=False keeps
        # the validation tolerance tight (flip to approx=True if ~1e-3 output
        # error is acceptable -- it is effectively free on the EUP).
        attn = attn * pl.reciprocal(denom, approx=False)
        o_ref[b * S:(b + 1) * S, :] = jnp.dot(
            attn, v, preferred_element_type=jnp.float32).astype(o_ref.dtype)


def _choose_b_blk(B, S):
    """Batches per grid step.

    Amortizes the ~0.35us/step pipeline overhead and fills MXU rows (target
    ~256 rows), while keeping >=2 grid steps when B > 1 (v7x has two
    TensorCores) and respecting the (8, 128) sublane rule on the row block.
    """
    target_rows = 256
    cands = [d for d in range(1, B) if B % d == 0 and (d * S) % 8 == 0]
    if B == 1 or not cands:
        return B                      # single full block (block dim == array dim)
    under = [d for d in cands if d * S <= target_rows]
    return max(under) if under else min(cands)


def qmsan_head_forward(x, w_v):
    """x: (B, S, E) f32, w_v: (H, E) f32 -> (B, S, H) f32."""
    B, S, E = x.shape
    H, E2 = w_v.shape
    assert E == E2
    n = E.bit_length() - 1
    assert (1 << n) == E, "embed_dim must be a power of two (amplitude embedding)"
    dA = 1 << (n // 2)                 # kept qubits (wires[:n//2])
    dB = E // dA                       # traced-out qubits

    b_blk = _choose_b_blk(B, S)
    assert B % b_blk == 0
    rows = b_blk * S
    grid = (B // b_blk,)

    # Lane-dense output / MXU-friendly N: zero-pad head_dim to a multiple of
    # 128 and pre-transpose the weight so the kernel never transposes it.
    Hp = max(128, -(-H // 128) * 128)
    w_t = jnp.zeros((E, Hp), jnp.float32).at[:, :H].set(
        w_v.T.astype(jnp.float32))                                 # (E, Hp)

    # Constant 0/1 selector that turns the dB-contraction of the density
    # matrix into an MXU matmul: sel[a*E + e, a2*dA + a2'] = 1 iff a == a2
    # and e // dB == a2'.
    k = np.arange(dA * E)
    m = np.arange(dA * dA)
    sel = jnp.asarray(((k[:, None] // E == m[None, :] // dA) &
                       ((k[:, None] % E) // dB == m[None, :] % dA))
                      .astype(np.float32))                         # (dA*E, dA*dA)

    x2 = x.reshape(B * S, E).astype(jnp.float32)

    kernel = functools.partial(_qmsan_kernel, b_blk=b_blk, S=S,
                               Hp=Hp, dA=dA, dB=dB)

    out2 = pl.pallas_call(
        kernel,
        out_shape=jax.ShapeDtypeStruct((B * S, Hp), jnp.float32),
        grid_spec=pltpu.PrefetchScalarGridSpec(
            num_scalar_prefetch=0,
            grid=grid,
            in_specs=[
                pl.BlockSpec((rows, E), lambda i: (i, 0)),
                pl.BlockSpec((E, Hp), lambda i: (0, 0)),
                pl.BlockSpec((dA * E, dA * dA), lambda i: (0, 0)),
            ],
            out_specs=pl.BlockSpec((rows, Hp), lambda i: (i, 0)),
        ),
        compiler_params=pltpu.CompilerParams(
            dimension_semantics=("parallel",),
            vmem_limit_bytes=32 * 1024 * 1024),
    )(x2, w_t, sel)

    return out2[:, :H].reshape(B, S, H)


def qmsan_head_reference(x, w_v):
    """Pure-JAX reference of the PyTorch forward (for validation)."""
    B, S, E = x.shape
    n = E.bit_length() - 1
    dA = 1 << (n // 2)
    dB = E // dA

    V = jnp.einsum('bse,he->bsh', x, w_v)
    psi = x / jnp.linalg.norm(x, axis=-1, keepdims=True)
    P = psi.reshape(B, S, dA, dB)
    rho = jnp.einsum('bsij,bskj->bsik', P, P)                  # (B,S,dA,dA)
    rho_f = rho.reshape(B, S, dA * dA)
    G = jnp.einsum('bsk,btk->bst', rho_f, rho_f)               # (B,S,S)
    mask = jnp.tril(jnp.ones((S, S), dtype=bool))
    attn = jnp.where(mask[None], G, 0.0)
    denom = jnp.maximum(jnp.sum(jnp.abs(attn), axis=-1, keepdims=True), 1e-12)
    attn = attn / denom
    return jnp.einsum('bst,bth->bsh', attn, V)


if __name__ == "__main__":
    # Small shapes consistent with the module: embed_dim must be 2^n.
    B, S, E, H = 2, 8, 16, 8

    key = jax.random.PRNGKey(0)
    kx, kw = jax.random.split(key)
    x = jax.random.normal(kx, (B, S, E), dtype=jnp.float32)
    # Deterministic init of V_proj weight (torch.nn.Linear shape: (out, in)).
    w_v = (jax.random.normal(kw, (H, E), dtype=jnp.float32)
           * (1.0 / jnp.sqrt(E))).astype(jnp.float32)

    out = qmsan_head_forward(x, w_v)
    out = jax.block_until_ready(out)

    ref = qmsan_head_reference(x, w_v)
    assert out.shape == (B, S, H)
    assert jnp.allclose(out, ref, atol=1e-4, rtol=1e-4), \
        f"mismatch vs reference: max |diff| = {jnp.max(jnp.abs(out - ref))}"

    print("KERNEL_OK")
</pallas_src>

<mosaic_0001>
module attributes {stable_mosaic.version = 11 : i64} {
  func.func @_qmsan_kernel(%arg0: i32, %arg1: memref<8x16xf32, #tpu.memory_space<vmem>>, %arg2: memref<16x128xf32, #tpu.memory_space<vmem>>, %arg3: memref<64x16xf32, #tpu.memory_space<vmem>>, %arg4: memref<8x128xf32, #tpu.memory_space<vmem>>) attributes {dimension_semantics = [#tpu.dimension_semantics<parallel>], iteration_bounds = array<i64: 2>, scalar_prefetch = 0 : i64, scratch_operands = 0 : i64, tpu.core_type = #tpu.core_type<tc>, window_params = [{transform_indices = @transform_0, window_bounds = array<i64: 8, 16>}, {pipeline_mode = #tpu.pipeline_mode<synchronous>, transform_indices = @transform_1, window_bounds = array<i64: 16, 128>}, {pipeline_mode = #tpu.pipeline_mode<synchronous>, transform_indices = @transform_2, window_bounds = array<i64: 64, 16>}, {transform_indices = @transform_3, window_bounds = array<i64: 8, 128>}]} {
    %c0 = arith.constant 0 : index
    %c0_0 = arith.constant 0 : index
    %0 = vector.load %arg1[%c0, %c0_0] : memref<8x16xf32, #tpu.memory_space<vmem>>, vector<8x16xf32>
    %c0_1 = arith.constant 0 : index
    %c0_2 = arith.constant 0 : index
    %1 = vector.load %arg2[%c0_1, %c0_2] : memref<16x128xf32, #tpu.memory_space<vmem>>, vector<16x128xf32>
    %c0_3 = arith.constant 0 : index
    %c0_4 = arith.constant 0 : index
    %2 = vector.load %arg3[%c0_3, %c0_4] : memref<64x16xf32, #tpu.memory_space<vmem>>, vector<64x16xf32>
    %cst = arith.constant dense<0.000000e+00> : vector<8x128xf32>
    %3 = tpu.matmul %0, %1, %cst {dimension_numbers = #tpu.dot_dimension_numbers<[1], [0], [0], [1], [0, 0, 1, 1], [], []>} : vector<8x16xf32>, vector<16x128xf32>, vector<8x128xf32> -> vector<8x128xf32>
    %4 = arith.mulf %0, %0 : vector<8x16xf32>
    %cst_5 = arith.constant dense<0.000000e+00> : vector<8xf32>
    %5 = vector.multi_reduction <add>, %4, %cst_5 [1] : vector<8x16xf32> to vector<8xf32>
    %6 = vector.shape_cast %5 : vector<8xf32> to vector<8x1xf32>
    %7 = math.rsqrt %6 : vector<8x1xf32>
    %8 = vector.broadcast %7 : vector<8x1xf32> to vector<8x16xf32>
    %9 = arith.mulf %0, %8 : vector<8x16xf32>
    %10 = vector.extract_strided_slice %9 {offsets = [0, 0], sizes = [8, 4], strides = [1, 1]} : vector<8x16xf32> to vector<8x4xf32>
    %11 = tpu.concatenate %10, %10, %10, %10 in 1 : vector<8x4xf32>, vector<8x4xf32>, vector<8x4xf32>, vector<8x4xf32> -> vector<8x16xf32>
    %12 = arith.mulf %11, %9 : vector<8x16xf32>
    %13 = vector.extract_strided_slice %9 {offsets = [0, 4], sizes = [8, 4], strides = [1, 1]} : vector<8x16xf32> to vector<8x4xf32>
    %14 = tpu.concatenate %13, %13, %13, %13 in 1 : vector<8x4xf32>, vector<8x4xf32>, vector<8x4xf32>, vector<8x4xf32> -> vector<8x16xf32>
    %15 = arith.mulf %14, %9 : vector<8x16xf32>
    %16 = vector.extract_strided_slice %9 {offsets = [0, 8], sizes = [8, 4], strides = [1, 1]} : vector<8x16xf32> to vector<8x4xf32>
    %17 = tpu.concatenate %16, %16, %16, %16 in 1 : vector<8x4xf32>, vector<8x4xf32>, vector<8x4xf32>, vector<8x4xf32> -> vector<8x16xf32>
    %18 = arith.mulf %17, %9 : vector<8x16xf32>
    %19 = vector.extract_strided_slice %9 {offsets = [0, 12], sizes = [8, 4], strides = [1, 1]} : vector<8x16xf32> to vector<8x4xf32>
    %20 = tpu.concatenate %19, %19, %19, %19 in 1 : vector<8x4xf32>, vector<8x4xf32>, vector<8x4xf32>, vector<8x4xf32> -> vector<8x16xf32>
    %21 = arith.mulf %20, %9 : vector<8x16xf32>
    %22 = tpu.concatenate %12, %15, %18, %21 in 1 : vector<8x16xf32>, vector<8x16xf32>, vector<8x16xf32>, vector<8x16xf32> -> vector<8x64xf32>
    %cst_6 = arith.constant dense<0.000000e+00> : vector<8x16xf32>
    %23 = tpu.matmul %22, %2, %cst_6 {dimension_numbers = #tpu.dot_dimension_numbers<[1], [0], [0], [1], [0, 0, 1, 1], [], []>} : vector<8x64xf32>, vector<64x16xf32>, vector<8x16xf32> -> vector<8x16xf32>
    %24 = tpu.iota {dimensions = array<i32: 0>} : vector<8x8xi32>
    %25 = tpu.iota {dimensions = array<i32: 1>} : vector<8x8xi32>
    %26 = arith.cmpi sle, %25, %24 : vector<8x8xi32>
    %cst_7 = arith.constant dense<0.000000e+00> : vector<8x8xf32>
    %27 = tpu.matmul %23, %23, %cst_7 {dimension_numbers = #tpu.dot_dimension_numbers<[1], [1], [0], [0], [0, 0, 1, 0], [], []>} : vector<8x16xf32>, vector<8x16xf32>, vector<8x8xf32> -> vector<8x8xf32>
    %cst_8 = arith.constant 0.000000e+00 : f32
    %28 = vector.broadcast %cst_8 : f32 to vector<8x8xf32>
    %29 = arith.select %26, %27, %28 : vector<8x8xi1>, vector<8x8xf32>
    %cst_9 = arith.constant dense<0.000000e+00> : vector<8xf32>
    %30 = vector.multi_reduction <add>, %29, %cst_9 [1] : vector<8x8xf32> to vector<8xf32>
    %31 = vector.shape_cast %30 : vector<8xf32> to vector<8x1xf32>
    %cst_10 = arith.constant 9.99999996E-13 : f32
    %32 = vector.broadcast %cst_10 : f32 to vector<8x1xf32>
    %33 = arith.maximumf %31, %32 : vector<8x1xf32>
    %34 = tpu.reciprocal %33 : vector<8x1xf32> -> vector<8x1xf32>
    %35 = vector.broadcast %34 : vector<8x1xf32> to vector<8x8xf32>
    %36 = arith.mulf %29, %35 : vector<8x8xf32>
    %cst_11 = arith.constant dense<0.000000e+00> : vector<8x128xf32>
    %37 = tpu.matmul %36, %3, %cst_11 {dimension_numbers = #tpu.dot_dimension_numbers<[1], [0], [0], [1], [0, 0, 1, 1], [], []>} : vector<8x8xf32>, vector<8x128xf32>, vector<8x128xf32> -> vector<8x128xf32>
    %c0_12 = arith.constant 0 : index
    %c0_13 = arith.constant 0 : index
    %38 = vector.load %arg4[%c0_12, %c0_13] : memref<8x128xf32, #tpu.memory_space<vmem>>, vector<8x128xf32>
    tpu.vector_store %arg4[%c0_12, %c0_13], %37 {strides = array<i32>} : memref<8x128xf32, #tpu.memory_space<vmem>>, vector<8x128xf32>,
    return
  }
  func.func @transform_0(%arg0: i32) -> (i32, i32) {
    %c0_i32 = arith.constant 0 : i32
    %c0_i32_0 = arith.constant 0 : i32
    return %arg0, %c0_i32 : i32, i32
  }
  func.func @transform_1(%arg0: i32) -> (i32, i32) {
    %c0_i32 = arith.constant 0 : i32
    %c0_i32_0 = arith.constant 0 : i32
    %c0_i32_1 = arith.constant 0 : i32
    return %c0_i32, %c0_i32_0 : i32, i32
  }
  func.func @transform_2(%arg0: i32) -> (i32, i32) {
    %c0_i32 = arith.constant 0 : i32
    %c0_i32_0 = arith.constant 0 : i32
    %c0_i32_1 = arith.constant 0 : i32
    return %c0_i32, %c0_i32_0 : i32, i32
  }
  func.func @transform_3(%arg0: i32) -> (i32, i32) {
    %c0_i32 = arith.constant 0 : i32
    %c0_i32_0 = arith.constant 0 : i32
    return %arg0, %c0_i32 : i32, i32
  }
}

</mosaic_0001>

<llo_original>
// kernel: tpu_custom_call.1
$region0: #{tpu_custom_call.1}
  #allocation0 [shape = 'u32[]', space=smem, size = 0x4, offset = 0x4, fixed_abs, tag = 'smem constant byte address 0x4 - core index']
  #allocation1 [shape = 'u32[144,128]{1,0:T(1,128)}', space=vmem, size = 0x12000, scoped, tag = 'internal scratch']
  %s0 = inlined_call_operand.vmem [shape: f32[16,16], index: 0, kind: input, shape index: {}]
  %s1 = inlined_call_operand.vmem [shape: f32[16,128], index: 1, kind: input, shape index: {}]
  %s2 = inlined_call_operand.vmem [shape: f32[64,16], index: 2, kind: input, shape index: {}]
  %s3 = inlined_call_operand.hbm [shape: f32[16,128], index: 3, kind: output, shape index: {}]
  %s4 = sld [smem:[#allocation0]]
  $region45: #{tpu_custom_call.1} parent=0
    _
  %s6 = ssub.s32 1, %s4
  %s7 = scalar_select 0, %s6, %s4
  $region1: #{tpu_custom_call.1} parent=0
    #allocation2 [shape = 'u8[8192]{0}', space=vmem, size = 0x2000, scoped, tag = 'output window, operand 0']
    #allocation3 [shape = 's32[2]{0}', space=sflag, size = 0x8, scoped, tag = 'scoped memory for tpu_custom_call.1']
    %8 = vsyncpa [#allocation3], 0
    %s9 = scalar_lea.sflag [#allocation3], 1
    %10 = vsyncpa %s9, 0
    loop: start=0, step=1, limit=4
    $region2: #{tpu_custom_call.1} parent=1 // loop_pre_header
      _
    $region3: #{tpu_custom_call.1} parent=1 // loop_header
      %s12 = sphi 0, %s16
      %p13 = scmp.ge.s32.totalorder %s12, 4
      %s22 = sphi 0, %s24
      %s25 = sphi 0, %s22
      %s26 = sphi 0, %s25
      %s42 = sphi 0, %s26
      %s46 = sphi 0, %s46
      %s48 = sphi 0, %s46
      %s49 = sphi 0, %s48
      %s63 = sphi 0, %s49
      %s67 = sphi 0, %s67
      %s69 = sphi 0, %s67
      %s70 = sphi 0, %s69
      %s84 = sphi 0, %s70
      %s90 = sphi 0, %s92
      %s93 = sphi 0, %s90
      %s94 = sphi 0, %s93
      %s110 = sphi 0, %s94
    $region4: #{tpu_custom_call.1} parent=1 // loop_header_branch
      %15 = sbr.rel (%p13) target = $region8
    $region5: #{tpu_custom_call.1} parent=1 // loop_body
      %s17 = ssub.s32 %s12, 1
      %s18 = ssub.s32 %s12, 2
      %s19 = sadd.s32 %s12, 1
      %s20 = ssub.s32 %s12, %s19
      %p21 = scmp.eq.s32.totalorder %s20, 0
      %s23 = sadd.s32 %s22, 1
      %s24 = scalar_select %p21, %s22, %s23
      %p27 = pneg %p21
      %p28 = scmp.eq.s32.totalorder %s12, 1
      %p29 = por %p27, %p28
      %p30 = scmp.ne.s32.totalorder %s22, %s25
      %p31 = scmp.eq.s32.totalorder %s12, 0
      %p32 = por %p30, %p31
      %p33 = scmp.ne.s32.totalorder %s22, %s25
      %p34 = scmp.eq.s32.totalorder %s17, 1
      %p35 = por %p33, %p34
      %p36 = scmp.ne.s32.totalorder %s25, %s26
      %p37 = scmp.eq.s32.totalorder %s17, 0
      %p38 = por %p36, %p37
      %p39 = scmp.ne.s32.totalorder %s25, %s26
      %p40 = scmp.eq.s32.totalorder %s18, 1
      %p41 = por %p39, %p40
      %p43 = scmp.ne.s32.totalorder %s26, %s42
      %p44 = scmp.eq.s32.totalorder %s18, 0
      %p45 = por %p43, %p44
      %s47 = sadd.s32 %s46, 1
      %p50 = scmp.eq.s32.totalorder %s12, 1
      %p51 = scmp.ne.s32.totalorder %s46, %s48
      %p52 = scmp.eq.s32.totalorder %s12, 0
      %p53 = por %p51, %p52
      %p54 = scmp.ne.s32.totalorder %s46, %s48
      %p55 = scmp.eq.s32.totalorder %s17, 1
      %p56 = por %p54, %p55
      %p57 = scmp.ne.s32.totalorder %s48, %s49
      %p58 = scmp.eq.s32.totalorder %s17, 0
      %p59 = por %p57, %p58
      %p60 = scmp.ne.s32.totalorder %s48, %s49
      %p61 = scmp.eq.s32.totalorder %s18, 1
      %p62 = por %p60, %p61
      %p64 = scmp.ne.s32.totalorder %s49, %s63
      %p65 = scmp.eq.s32.totalorder %s18, 0
      %p66 = por %p64, %p65
      %s68 = sadd.s32 %s67, 1
      %p71 = scmp.eq.s32.totalorder %s12, 1
      %p72 = scmp.ne.s32.totalorder %s67, %s69
      %p73 = scmp.eq.s32.totalorder %s12, 0
      %p74 = por %p72, %p73
      %p75 = scmp.ne.s32.totalorder %s67, %s69
      %p76 = scmp.eq.s32.totalorder %s17, 1
      %p77 = por %p75, %p76
      %p78 = scmp.ne.s32.totalorder %s69, %s70
      %p79 = scmp.eq.s32.totalorder %s17, 0
      %p80 = por %p78, %p79
      %p81 = scmp.ne.s32.totalorder %s69, %s70
      %p82 = scmp.eq.s32.totalorder %s18, 1
      %p83 = por %p81, %p82
      %p85 = scmp.ne.s32.totalorder %s70, %s84
      %p86 = scmp.eq.s32.totalorder %s18, 0
      %p87 = por %p85, %p86
      %s88 = ssub.s32 %s12, %s19
      %p89 = scmp.eq.s32.totalorder %s88, 0
      %s91 = sadd.s32 %s90, 1
      %s92 = scalar_select %p89, %s90, %s91
      %p95 = pneg %p89
      %p96 = scmp.eq.s32.totalorder %s12, 1
      %p97 = por %p95, %p96
      %p98 = scmp.ne.s32.totalorder %s90, %s93
      %p99 = scmp.eq.s32.totalorder %s12, 0
      %p100 = por %p98, %p99
      %p101 = scmp.ne.s32.totalorder %s90, %s93
      %p102 = scmp.eq.s32.totalorder %s17, 1
      %p103 = por %p101, %p102
      %p104 = scmp.ne.s32.totalorder %s93, %s94
      %p105 = scmp.eq.s32.totalorder %s17, 0
      %p106 = por %p104, %p105
      %p107 = scmp.ne.s32.totalorder %s93, %s94
      %p108 = scmp.eq.s32.totalorder %s18, 1
      %p109 = por %p107, %p108
      %p111 = scmp.ne.s32.totalorder %s94, %s110
      %p112 = scmp.eq.s32.totalorder %s18, 0
      %p113 = por %p111, %p112
      %p114 = scmp.le.s32.totalorder 1, %s12
      %p115 = scmp.lt.s32.totalorder %s12, 3
      %p116 = pnand %p114, %p115
      %p117 = pneg %p116
      // Predicated region
      $region9: #{tpu_custom_call.1} parent=5 // pred_check
        _
      $region10: #{tpu_custom_call.1} parent=5 // pred_check_branch
        %119 = sbr.rel (%p116) target = $region12
      $region11: #{tpu_custom_call.1} parent=5 // pred_region
        %s120 = ssub.s32 %s12, 1
        // Predicated region
        $region13: #{tpu_custom_call.1} parent=11 // pred_check
          %p121 = pneg %p59
        $region14: #{tpu_custom_call.1} parent=11 // pred_check_branch
          %123 = sbr.rel (%p121) target = $region16
        $region15: #{tpu_custom_call.1} parent=11 // pred_region
          _
        $region16: #{tpu_custom_call.1} parent=11 // pred_fallthru
          _
        // Predicated region
        $region17: #{tpu_custom_call.1} parent=11 // pred_check
          %p124 = pneg %p80
        $region18: #{tpu_custom_call.1} parent=11 // pred_check_branch
          %126 = sbr.rel (%p124) target = $region20
        $region19: #{tpu_custom_call.1} parent=11 // pred_region
          _
        $region20: #{tpu_custom_call.1} parent=11 // pred_fallthru
          _
      $region12: #{tpu_custom_call.1} parent=5 // pred_fallthru
        _
      %p127 = scmp.lt.s32.totalorder %s12, 2
      // Predicated region
      $region21: #{tpu_custom_call.1} parent=5 // pred_check
        %p128 = pneg %p127
      $region22: #{tpu_custom_call.1} parent=5 // pred_check_branch
        %130 = sbr.rel (%p128) target = $region24
      $region23: #{tpu_custom_call.1} parent=5 // pred_region
        // Predicated region
        $region25: #{tpu_custom_call.1} parent=23 // pred_check
          %p131 = pneg %p32
        $region26: #{tpu_custom_call.1} parent=23 // pred_check_branch
          %133 = sbr.rel (%p131) target = $region28
        $region27: #{tpu_custom_call.1} parent=23 // pred_region
          %p134 = scmp.lt.s32.totalorder %s12, 1
          %s135 = scalar_select %p134, %s12, 1
          %s136 = smul.addr %s135, 8
          %s137 = scalar_lea.vmem %s0, %s136
        $region28: #{tpu_custom_call.1} parent=23 // pred_fallthru
          _
      $region24: #{tpu_custom_call.1} parent=5 // pred_fallthru
        _
      %p138 = scmp.le.s32.totalorder 1, %s12
      %p139 = scmp.lt.s32.totalorder %s12, 3
      %p140 = pnand %p138, %p139
      %p141 = pneg %p140
      // Predicated region
      $region29: #{tpu_custom_call.1} parent=5 // pred_check
        _
      $region30: #{tpu_custom_call.1} parent=5 // pred_check_branch
        %143 = sbr.rel (%p140) target = $region32
      $region31: #{tpu_custom_call.1} parent=5 // pred_region
        %s144 = ssub.s32 %s12, 1
        %p145 = scmp.lt.s32.totalorder %s17, 1
        %s146 = scalar_select %p145, %s17, 1
        %s147 = smul.addr %s146, 8
        %s148 = scalar_lea.vmem %s0, %s147
        %p149 = pneg %p38
        %p150 = pneg %p35
        %p151 = pneg %p59
        %p152 = pneg %p56
        %p153 = pneg %p80
        %p154 = pneg %p77
        %p155 = pneg %p106
        %p156 = pneg %p103
        %s157 = sand.u32 %s93, 1
        %s158 = scalar_lea.sflag [#allocation3], %s157
        %s159 = sand.u32 %s93, 1
        %s160 = smul.addr %s159, 8
        %s161 = scalar_lea.vmem [#allocation2], %s160
        %p162 = scmp.lt.s32.totalorder %s17, 1
        %s163 = scalar_select %p162, %s17, 1
        %s164 = smul.addr %s163, 8
        %s165 = scalar_lea.vmem %s0, %s164
        %v166 = vld [vmem:[%s165] sm:$0xff]
        %v167 = vld [vmem:[%s1] sm:$0xff]
        %v168 = vld [vmem:[%s1 + $0x8] sm:$0xff]
        %v169 = vld [vmem:[%s2] sm:$0xff]
        %v170 = vld [vmem:[%s2 + $0x8] sm:$0xff]
        %v171 = vld [vmem:[%s2 + $0x10] sm:$0xff]
        %v172 = vld [vmem:[%s2 + $0x18] sm:$0xff]
        %v173 = vld [vmem:[%s2 + $0x20] sm:$0xff]
        %v174 = vld [vmem:[%s2 + $0x28] sm:$0xff]
        %v175 = vld [vmem:[%s2 + $0x30] sm:$0xff]
        %v176 = vld [vmem:[%s2 + $0x38] sm:$0xff]
        %vm177 = vcmask 130048
        %v179 = vsel %vm177, %v166, 0
        %181 = vmatprep.subr.mxu0 0.0
        %182 = vmatpush1.msra.mxu0 %v167
        %183 = vmatprep.subr.mxu0 0.0
        %184 = vmatpush1.msra.mxu0 %v168
        %185 = vmatprep.subr.mxu0 0.0
        %186 = vmatpush1.msra.mxu0 0.0
        %187 = vmatprep.subr.mxu0 0.0
        %188 = vmatpush1.msra.mxu0 0.0
        %189 = vmatprep.subr.mxu0 0.0
        %190 = vmatpush1.msra.mxu0 0.0
        %191 = vmatprep.subr.mxu0 0.0
        %192 = vmatpush1.msra.mxu0 0.0
        %193 = vmatprep.subr.mxu0 0.0
        %194 = vmatpush1.msra.mxu0 0.0
        %195 = vmatprep.subr.mxu0 0.0
        %196 = vmatpush1.msra.mxu0 0.0
        %197 = vmatprep.subr.mxu0 0.0
        %198 = vmatpush1.msra.mxu0 0.0
        %199 = vmatprep.subr.mxu0 0.0
        %200 = vmatpush1.msra.mxu0 0.0
        %201 = vmatprep.subr.mxu0 0.0
        %202 = vmatpush1.msra.mxu0 0.0
        %203 = vmatprep.subr.mxu0 0.0
        %204 = vmatpush1.msra.mxu0 0.0
        %205 = vmatprep.subr.mxu0 0.0
        %206 = vmatpush1.msra.mxu0 0.0
        %207 = vmatprep.subr.mxu0 0.0
        %208 = vmatpush1.msra.mxu0 0.0
        %209 = vmatprep.subr.mxu0 0.0
        %210 = vmatpush1.msra.mxu0 0.0
        %211 = vmatprep.subr.mxu0 0.0
        %212 = vmatpush1.msra.mxu0 0.0
        %213 = vmatprep.subr.mxu0 0.0
        %214 = vmatpush1.msra.mxu0 0.0
        %215 = vmatprep.subr.mxu0 0.0
        %216 = vmatpush1.msra.mxu0 0.0
        %217 = vmatprep.subr.mxu0 0.0
        %218 = vmatpush1.msra.mxu0 0.0
        %219 = vmatprep.subr.mxu0 0.0
        %220 = vmatpush1.msra.mxu0 0.0
        %221 = vmatprep.subr.mxu0 0.0
        %222 = vmatpush1.msra.mxu0 0.0
        %223 = vmatprep.subr.mxu0 0.0
        %224 = vmatpush1.msra.mxu0 0.0
        %225 = vmatprep.subr.mxu0 0.0
        %226 = vmatpush1.msra.mxu0 0.0
        %227 = vmatprep.subr.mxu0 0.0
        %228 = vmatpush1.msra.mxu0 0.0
        %229 = vmatprep.subr.mxu0 0.0
        %230 = vmatpush1.msra.mxu0 0.0
        %231 = vmatprep.subr.mxu0 0.0
        %232 = vmatpush1.msra.mxu0 0.0
        %233 = vmatprep.subr.mxu0 0.0
        %234 = vmatpush1.msra.mxu0 0.0
        %235 = vmatprep.subr.mxu0 0.0
        %236 = vmatpush1.msra.mxu0 0.0
        %237 = vmatprep.subr.mxu0 0.0
        %238 = vmatpush1.msra.mxu0 0.0
        %239 = vmatprep.subr.mxu0 0.0
        %240 = vmatpush1.msra.mxu0 0.0
        %241 = vmatprep.subr.mxu0 0.0
        %242 = vmatpush1.msra.mxu0 0.0
        %243 = vmatprep.subr.mxu0 0.0
        %244 = vmatpush1.msra.mxu0 0.0
        %245 = vmatprep.mubr.f32.mxu0 0.0
        %246 = vmatmul.mubr.f32.gmra.mrb[0].mxu0 %v179
        %v247 = vpop.f32.mrb[0].mxu0
        %v248 = vadd.f32 0.0, %v247
        %v249 = vpop.f32.mrb[0].mxu0
        %250 = vdwg.mxu0
        %v251 = vmul.f32 %v166, %v166
        %v252 = vsel %vm177, %v251, 0.0
        %253 = vadd.xlane.f32.xlu0 %v252
        %v254 = vpop.xlane.xlu0 %253
        %v255 = vrsqrt.pop %v254
        %v256 = vmul.f32 %v166, %v255
        %258 = vrot.lane.b32.xlu0 %v256, 4
        %v259 = vpop.permute.xlu0 %258
        %261 = vrot.lane.b32.xlu0 %v256, 8
        %v262 = vpop.permute.xlu0 %261
        %264 = vrot.lane.b32.xlu0 %v256, 12
        %v265 = vpop.permute.xlu0 %264
        %vm267 = vcmask 31744
        %v268 = vsel %vm267, %v256, %v259
        %vm269 = vcmask 64512
        %v270 = vsel %vm269, %v268, %v262
        %vm271 = vcmask 97280
        %v272 = vsel %vm271, %v270, %v265
        %v273 = vmul.f32 %v272, %v256
        %274 = vrot.lane.b32.xlu0 %v256, 124
        %v275 = vpop.permute.xlu0 %274
        %v277 = vsel %vm267, %v275, %v256
        %v278 = vsel %vm269, %v277, %v259
        %v279 = vsel %vm271, %v278, %v262
        %v280 = vmul.f32 %v279, %v256
        %281 = vrot.lane.b32.xlu0 %v256, 120
        %v282 = vpop.permute.xlu0 %281
        %v284 = vsel %vm267, %v282, %v275
        %v285 = vsel %vm269, %v284, %v256
        %v286 = vsel %vm271, %v285, %v259
        %v287 = vmul.f32 %v286, %v256
        %288 = vrot.lane.b32.xlu0 %v256, 116
        %v289 = vpop.permute.xlu0 %288
        %v291 = vsel %vm267, %v289, %v282
        %v292 = vsel %vm269, %v291, %v275
        %v293 = vsel %vm271, %v292, %v256
        %v294 = vmul.f32 %v293, %v256
        %296 = vrot.lane.b32.xlu0 %v280, 16
        %v297 = vpop.permute.xlu0 %296
        %300 = vrot.lane.b32.xlu0 %v287, 32
        %v301 = vpop.permute.xlu0 %300
        %304 = vrot.lane.b32.xlu0 %v294, 48
        %v305 = vpop.permute.xlu0 %304
        %v307 = vsel %vm177, %v273, %v297
        %vm308 = vcmask 261120
        %v309 = vsel %vm308, %v307, %v301
        %vm310 = vcmask 392192
        %v311 = vsel %vm310, %v309, %v305
        %vm312 = vcmask 523264
        %v314 = vsel %vm312, %v311, 0
        %316 = vmatprep.subr.mxu0 0.0
        %317 = vmatpush1.msra.mxu0 %v169
        %318 = vmatprep.subr.mxu0 0.0
        %319 = vmatpush1.msra.mxu0 %v170
        %320 = vmatprep.subr.mxu0 0.0
        %321 = vmatpush1.msra.mxu0 %v171
        %322 = vmatprep.subr.mxu0 0.0
        %323 = vmatpush1.msra.mxu0 %v172
        %324 = vmatprep.subr.mxu0 0.0
        %325 = vmatpush1.msra.mxu0 %v173
        %326 = vmatprep.subr.mxu0 0.0
        %327 = vmatpush1.msra.mxu0 %v174
        %328 = vmatprep.subr.mxu0 0.0
        %329 = vmatpush1.msra.mxu0 %v175
        %330 = vmatprep.subr.mxu0 0.0
        %331 = vmatpush1.msra.mxu0 %v176
        %332 = vmatprep.subr.mxu0 0.0
        %333 = vmatpush1.msra.mxu0 0.0
        %334 = vmatprep.subr.mxu0 0.0
        %335 = vmatpush1.msra.mxu0 0.0
        %336 = vmatprep.subr.mxu0 0.0
        %337 = vmatpush1.msra.mxu0 0.0
        %338 = vmatprep.subr.mxu0 0.0
        %339 = vmatpush1.msra.mxu0 0.0
        %340 = vmatprep.subr.mxu0 0.0
        %341 = vmatpush1.msra.mxu0 0.0
        %342 = vmatprep.subr.mxu0 0.0
        %343 = vmatpush1.msra.mxu0 0.0
        %344 = vmatprep.subr.mxu0 0.0
        %345 = vmatpush1.msra.mxu0 0.0
        %346 = vmatprep.subr.mxu0 0.0
        %347 = vmatpush1.msra.mxu0 0.0
        %348 = vmatprep.subr.mxu0 0.0
        %349 = vmatpush1.msra.mxu0 0.0
        %350 = vmatprep.subr.mxu0 0.0
        %351 = vmatpush1.msra.mxu0 0.0
        %352 = vmatprep.subr.mxu0 0.0
        %353 = vmatpush1.msra.mxu0 0.0
        %354 = vmatprep.subr.mxu0 0.0
        %355 = vmatpush1.msra.mxu0 0.0
        %356 = vmatprep.subr.mxu0 0.0
        %357 = vmatpush1.msra.mxu0 0.0
        %358 = vmatprep.subr.mxu0 0.0
        %359 = vmatpush1.msra.mxu0 0.0
        %360 = vmatprep.subr.mxu0 0.0
        %361 = vmatpush1.msra.mxu0 0.0
        %362 = vmatprep.subr.mxu0 0.0
        %363 = vmatpush1.msra.mxu0 0.0
        %364 = vmatprep.subr.mxu0 0.0
        %365 = vmatpush1.msra.mxu0 0.0
        %366 = vmatprep.subr.mxu0 0.0
        %367 = vmatpush1.msra.mxu0 0.0
        %368 = vmatprep.subr.mxu0 0.0
        %369 = vmatpush1.msra.mxu0 0.0
        %370 = vmatprep.subr.mxu0 0.0
        %371 = vmatpush1.msra.mxu0 0.0
        %372 = vmatprep.subr.mxu0 0.0
        %373 = vmatpush1.msra.mxu0 0.0
        %374 = vmatprep.subr.mxu0 0.0
        %375 = vmatpush1.msra.mxu0 0.0
        %376 = vmatprep.subr.mxu0 0.0
        %377 = vmatpush1.msra.mxu0 0.0
        %378 = vmatprep.subr.mxu0 0.0
        %379 = vmatpush1.msra.mxu0 0.0
        %380 = vmatprep.mubr.f32.mxu0 0.0
        %381 = vmatmul.mubr.f32.gmra.mrb[0].mxu0 %v314
        %v382 = vpop.f32.mrb[0].mxu0
        %v383 = vadd.f32 0.0, %v382
        %v384 = vpop.f32.mrb[0].mxu0
        %385 = vdwg.mxu0
        %v386 = vlaneseq
        %v387 = vshrl.u32 %v386, 7
        %v388 = vlaneseq
        %v389 = vand.u32 %v388, 127
        %vm390 = vcmp.le.s32.totalorder %v389, %v387
        %v392 = vsel %vm177, %v383, 0
        %394 = vmatprep.subr.mxu0 0.0
        %395 = vmatpush1.xpose.msra.mxu0 %v392
        %396 = vmatprep.subr.mxu0 0.0
        %397 = vmatpush1.xpose.msra.mxu0 0.0
        %398 = vmatprep.subr.mxu0 0.0
        %399 = vmatpush1.xpose.msra.mxu0 0.0
        %400 = vmatprep.subr.mxu0 0.0
        %401 = vmatpush1.xpose.msra.mxu0 0.0
        %402 = vmatprep.subr.mxu0 0.0
        %403 = vmatpush1.xpose.msra.mxu0 0.0
        %404 = vmatprep.subr.mxu0 0.0
        %405 = vmatpush1.xpose.msra.mxu0 0.0
        %406 = vmatprep.subr.mxu0 0.0
        %407 = vmatpush1.xpose.msra.mxu0 0.0
        %408 = vmatprep.subr.mxu0 0.0
        %409 = vmatpush1.xpose.msra.mxu0 0.0
        %410 = vmatprep.subr.mxu0 0.0
        %411 = vmatpush1.xpose.msra.mxu0 0.0
        %412 = vmatprep.subr.mxu0 0.0
        %413 = vmatpush1.xpose.msra.mxu0 0.0
        %414 = vmatprep.subr.mxu0 0.0
        %415 = vmatpush1.xpose.msra.mxu0 0.0
        %416 = vmatprep.subr.mxu0 0.0
        %417 = vmatpush1.xpose.msra.mxu0 0.0
        %418 = vmatprep.subr.mxu0 0.0
        %419 = vmatpush1.xpose.msra.mxu0 0.0
        %420 = vmatprep.subr.mxu0 0.0
        %421 = vmatpush1.xpose.msra.mxu0 0.0
        %422 = vmatprep.subr.mxu0 0.0
        %423 = vmatpush1.xpose.msra.mxu0 0.0
        %424 = vmatprep.subr.mxu0 0.0
        %425 = vmatpush1.xpose.msra.mxu0 0.0
        %426 = vmatprep.subr.mxu0 0.0
        %427 = vmatpush1.xpose.msra.mxu0 0.0
        %428 = vmatprep.subr.mxu0 0.0
        %429 = vmatpush1.xpose.msra.mxu0 0.0
        %430 = vmatprep.subr.mxu0 0.0
        %431 = vmatpush1.xpose.msra.mxu0 0.0
        %432 = vmatprep.subr.mxu0 0.0
        %433 = vmatpush1.xpose.msra.mxu0 0.0
        %434 = vmatprep.subr.mxu0 0.0
        %435 = vmatpush1.xpose.msra.mxu0 0.0
        %436 = vmatprep.subr.mxu0 0.0
        %437 = vmatpush1.xpose.msra.mxu0 0.0
        %438 = vmatprep.subr.mxu0 0.0
        %439 = vmatpush1.xpose.msra.mxu0 0.0
        %440 = vmatprep.subr.mxu0 0.0
        %441 = vmatpush1.xpose.msra.mxu0 0.0
        %442 = vmatprep.subr.mxu0 0.0
        %443 = vmatpush1.xpose.msra.mxu0 0.0
        %444 = vmatprep.subr.mxu0 0.0
        %445 = vmatpush1.xpose.msra.mxu0 0.0
        %446 = vmatprep.subr.mxu0 0.0
        %447 = vmatpush1.xpose.msra.mxu0 0.0
        %448 = vmatprep.subr.mxu0 0.0
        %449 = vmatpush1.xpose.msra.mxu0 0.0
        %450 = vmatprep.subr.mxu0 0.0
        %451 = vmatpush1.xpose.msra.mxu0 0.0
        %452 = vmatprep.subr.mxu0 0.0
        %453 = vmatpush1.xpose.msra.mxu0 0.0
        %454 = vmatprep.subr.mxu0 0.0
        %455 = vmatpush1.xpose.msra.mxu0 0.0
        %456 = vmatprep.subr.mxu0 0.0
        %457 = vmatpush1.xpose.msra.mxu0 0.0
        %458 = vmatprep.mubr.f32.mxu0 0.0
        %459 = vmatmul.mubr.f32.gmra.mrb[0].mxu0 %v392
        %v460 = vpop.f32.mrb[0].mxu0
        %v461 = vadd.f32 0.0, %v460
        %v462 = vpop.f32.mrb[0].mxu0
        %463 = vdwg.mxu0
        %v464 = vsel %vm390, %v461, 0.0
        %v465 = vsel %vm269, %v464, 0.0
        %466 = vadd.xlane.f32.xlu0 %v465
        %v467 = vpop.xlane.xlu0 %466
        %v468 = vmax.f32 %v467, 1e-12
        %v469 = vrcp.pop %v468
        %v470 = vmul.f32 %v464, %v469
        %v472 = vsel %vm269, %v470, 0
        %474 = vmatprep.subr.mxu0 0.0
        %475 = vmatpush1.msra.mxu0 %v248
        %476 = vmatprep.subr.mxu0 0.0
        %477 = vmatpush1.msra.mxu0 0.0
        %478 = vmatprep.subr.mxu0 0.0
        %479 = vmatpush1.msra.mxu0 0.0
        %480 = vmatprep.subr.mxu0 0.0
        %481 = vmatpush1.msra.mxu0 0.0
        %482 = vmatprep.subr.mxu0 0.0
        %483 = vmatpush1.msra.mxu0 0.0
        %484 = vmatprep.subr.mxu0 0.0
        %485 = vmatpush1.msra.mxu0 0.0
        %486 = vmatprep.subr.mxu0 0.0
        %487 = vmatpush1.msra.mxu0 0.0
        %488 = vmatprep.subr.mxu0 0.0
        %489 = vmatpush1.msra.mxu0 0.0
        %490 = vmatprep.subr.mxu0 0.0
        %491 = vmatpush1.msra.mxu0 0.0
        %492 = vmatprep.subr.mxu0 0.0
        %493 = vmatpush1.msra.mxu0 0.0
        %494 = vmatprep.subr.mxu0 0.0
        %495 = vmatpush1.msra.mxu0 0.0
        %496 = vmatprep.subr.mxu0 0.0
        %497 = vmatpush1.msra.mxu0 0.0
        %498 = vmatprep.subr.mxu0 0.0
        %499 = vmatpush1.msra.mxu0 0.0
        %500 = vmatprep.subr.mxu0 0.0
        %501 = vmatpush1.msra.mxu0 0.0
        %502 = vmatprep.subr.mxu0 0.0
        %503 = vmatpush1.msra.mxu0 0.0
        %504 = vmatprep.subr.mxu0 0.0
        %505 = vmatpush1.msra.mxu0 0.0
        %506 = vmatprep.subr.mxu0 0.0
        %507 = vmatpush1.msra.mxu0 0.0
        %508 = vmatprep.subr.mxu0 0.0
        %509 = vmatpush1.msra.mxu0 0.0
        %510 = vmatprep.subr.mxu0 0.0
        %511 = vmatpush1.msra.mxu0 0.0
        %512 = vmatprep.subr.mxu0 0.0
        %513 = vmatpush1.msra.mxu0 0.0
        %514 = vmatprep.subr.mxu0 0.0
        %515 = vmatpush1.msra.mxu0 0.0
        %516 = vmatprep.subr.mxu0 0.0
        %517 = vmatpush1.msra.mxu0 0.0
        %518 = vmatprep.subr.mxu0 0.0
        %519 = vmatpush1.msra.mxu0 0.0
        %520 = vmatprep.subr.mxu0 0.0
        %521 = vmatpush1.msra.mxu0 0.0
        %522 = vmatprep.subr.mxu0 0.0
        %523 = vmatpush1.msra.mxu0 0.0
        %524 = vmatprep.subr.mxu0 0.0
        %525 = vmatpush1.msra.mxu0 0.0
        %526 = vmatprep.subr.mxu0 0.0
        %527 = vmatpush1.msra.mxu0 0.0
        %528 = vmatprep.subr.mxu0 0.0
        %529 = vmatpush1.msra.mxu0 0.0
        %530 = vmatprep.subr.mxu0 0.0
        %531 = vmatpush1.msra.mxu0 0.0
        %532 = vmatprep.subr.mxu0 0.0
        %533 = vmatpush1.msra.mxu0 0.0
        %534 = vmatprep.subr.mxu0 0.0
        %535 = vmatpush1.msra.mxu0 0.0
        %536 = vmatprep.subr.mxu0 0.0
        %537 = vmatpush1.msra.mxu0 0.0
        %538 = vmatprep.mubr.f32.mxu0 0.0
        %539 = vmatmul.mubr.f32.gmra.mrb[0].mxu0 %v472
        %v540 = vpop.f32.mrb[0].mxu0
        %v541 = vadd.f32 0.0, %v540
        %v542 = vpop.f32.mrb[0].mxu0
        %543 = vdwg.mxu0
        %544 = vst [vmem:[%s161] sm:$0xff] %v541
        %s545 = sand.u32 %s93, 1
        %s546 = scalar_lea.sflag [#allocation3], %s545
        %s547 = sand.u32 %s93, 1
        %s548 = smul.addr %s547, 8
        %s549 = scalar_lea.vmem [#allocation2], %s548
        // Predicated region
        $region33: #{tpu_custom_call.1} parent=31 // pred_check
          %p550 = pneg %p103
        $region34: #{tpu_custom_call.1} parent=31 // pred_check_branch
          %552 = sbr.rel (%p550) target = $region36
        $region35: #{tpu_custom_call.1} parent=31 // pred_region
          %s554 = ssub.s32 128, 128
          %555 = vsyncadd %s546, %s554
          %s556 = smul.addr %s17, 128
          %s557 = scalar_lea.hbm %s3, %s556
          %s559 = sshll.u32 %s549, 4
          %s560 = int_to_ptr.vmem [resolvable:$true] %s559
          %562 = dma.vmem_to_hbm [thread:$0]  %s560, 128, %s557, %s546
        $region36: #{tpu_custom_call.1} parent=31 // pred_fallthru
          _
      $region32: #{tpu_custom_call.1} parent=5 // pred_fallthru
        _
      %p563 = scmp.le.s32.totalorder 2, %s12
      // Predicated region
      $region37: #{tpu_custom_call.1} parent=5 // pred_check
        %p564 = pneg %p563
      $region38: #{tpu_custom_call.1} parent=5 // pred_check_branch
        %566 = sbr.rel (%p564) target = $region40
      $region39: #{tpu_custom_call.1} parent=5 // pred_region
        %s567 = ssub.s32 %s12, 2
        // Predicated region
        $region41: #{tpu_custom_call.1} parent=39 // pred_check
          %p568 = pneg %p109
        $region42: #{tpu_custom_call.1} parent=39 // pred_check_branch
          %570 = sbr.rel (%p568) target = $region44
        $region43: #{tpu_custom_call.1} parent=39 // pred_region
          %s571 = sand.u32 %s94, 1
          %s572 = scalar_lea.sflag [#allocation3], %s571
          %s573 = sand.u32 %s94, 1
          %s574 = smul.addr %s573, 8
          %s575 = scalar_lea.vmem [#allocation2], %s574
          %576 = dma.done %s572, 128
        $region44: #{tpu_custom_call.1} parent=39 // pred_fallthru
          _
      $region40: #{tpu_custom_call.1} parent=5 // pred_fallthru
        _
    $region6: #{tpu_custom_call.1} parent=1 // loop_footer
      %s16 = sadd.s32 1, %s12
    $region7: #{tpu_custom_call.1} parent=1 // loop_footer_branch
      %11 = sbr.rel target = $region3
    $region8: #{tpu_custom_call.1} parent=1 // loop_exit
      _
    %577 = vsyncpa [#allocation3], 1
    %s578 = scalar_lea.sflag [#allocation3], 1
    %579 = vsyncpa %s578, 1

</llo_original>
